<compile_context>
chip_gen: v5e
topology: v5e:2x2
jax: 0.10.0
libtpu: 0.0.40
codegen_flags: <defaults>
</compile_context>

<pallas_src>
import functools
import math

import jax
import jax.numpy as jnp
from jax import lax
from jax.experimental import pallas as pl
from jax.experimental.pallas import tpu as pltpu


# ----------------------------------------------------------------------------
# small helpers (host-side glue)
# ----------------------------------------------------------------------------

def _round_up(x, m):
    return ((x + m - 1) // m) * m


def _pad2d(x, rows, cols):
    r, c = x.shape
    if r == rows and c == cols:
        return x
    return jnp.pad(x, ((0, rows - r), (0, cols - c)))


def _pick_tile(dim, target):
    """Whole dim if it fits the target (full-extent block, no padding); else the
    largest multiple-of-128 tile <= target that divides dim (no dead work);
    else a multiple of 128 (caller pads dim up)."""
    if dim <= target:
        return dim
    t = (target // 128) * 128
    while t >= 128:
        if dim % t == 0:
            return t
        t -= 128
    return (target // 128) * 128


_VMEM_LIMIT = None


def _vmem_limit_bytes():
    """Generation-gated VMEM budget (v5e/v6e: 128 MiB physical, v7x: 64 MiB)."""
    global _VMEM_LIMIT
    if _VMEM_LIMIT is None:
        try:
            cap = int(pltpu.get_tpu_info().vmem_capacity_bytes)
        except Exception:
            cap = 64 * 1024 * 1024
        _VMEM_LIMIT = int(min(cap // 2, 64 * 1024 * 1024))
    return _VMEM_LIMIT


# ----------------------------------------------------------------------------
# Tiled matmul kernel: grid (M/tm, N/tn, K/tk), f32 accumulator, bf16 MXU ops,
# optional bias / QuickGELU / fused residual add in the finalize step.
# ----------------------------------------------------------------------------

def _matmul_kernel(x_ref, w_ref, *rest, activation, n_k, has_bias, has_res):
    idx = 0
    b_ref = rest[idx] if has_bias else None
    idx += 1 if has_bias else 0
    r_ref = rest[idx] if has_res else None
    idx += 1 if has_res else 0
    o_ref, acc_ref = rest[idx], rest[idx + 1]

    @pl.when(pl.program_id(2) == 0)
    def _():
        acc_ref[...] = jnp.zeros_like(acc_ref)

    acc_ref[...] += jnp.dot(x_ref[...].astype(jnp.bfloat16),
                            w_ref[...].astype(jnp.bfloat16),
                            preferred_element_type=jnp.float32)

    @pl.when(pl.program_id(2) == n_k - 1)
    def _():
        y = acc_ref[...]
        if has_bias:
            y = y + b_ref[...].astype(jnp.float32)
        if activation == "quick_gelu":                 # CLIP QuickGELU
            y = y * jax.nn.sigmoid(1.702 * y)
        if has_res:                                    # fused residual add
            y = y + r_ref[...].astype(jnp.float32)
        o_ref[...] = y.astype(o_ref.dtype)


def linear(x, w, b=None, residual=None, activation=None, tm=512, tk=512, tn=512):
    """x: (M, K) f32, w: (K, N) bf16-at-rest, optional b: (N,), optional
    residual: (M, N) added in the finalize step -> (M, N) f32."""
    M, K = x.shape
    N = w.shape[1]
    tm = min(tm, _round_up(M, 8))
    tk = _pick_tile(K, tk)
    tn = _pick_tile(N, tn)
    Mp, Kp, Np = _round_up(M, tm), _round_up(K, tk), _round_up(N, tn)
    xp = _pad2d(x, Mp, Kp)
    wp = _pad2d(w, Kp, Np)
    grid = (Mp // tm, Np // tn, Kp // tk)

    in_specs = [pl.BlockSpec((tm, tk), lambda i, j, k: (i, k)),
                pl.BlockSpec((tk, tn), lambda i, j, k: (k, j))]
    args = [xp, wp]
    if b is not None:
        in_specs.append(pl.BlockSpec((1, tn), lambda i, j, k: (0, j)))
        args.append(_pad2d(b.reshape(1, N), 1, Np))
    if residual is not None:                           # constant in k -> fetched once
        in_specs.append(pl.BlockSpec((tm, tn), lambda i, j, k: (i, j)))
        args.append(_pad2d(residual, Mp, Np))

    out = pl.pallas_call(
        functools.partial(_matmul_kernel, activation=activation, n_k=grid[2],
                          has_bias=b is not None, has_res=residual is not None),
        grid=grid,
        in_specs=in_specs,
        out_specs=pl.BlockSpec((tm, tn), lambda i, j, k: (i, j)),
        out_shape=jax.ShapeDtypeStruct((Mp, Np), x.dtype),
        scratch_shapes=[pltpu.VMEM((tm, tn), jnp.float32)],
        compiler_params=pltpu.CompilerParams(
            dimension_semantics=("parallel", "parallel", "arbitrary"),
            vmem_limit_bytes=_vmem_limit_bytes()),
    )(*args)
    return out[:M, :N]


# ----------------------------------------------------------------------------
# Fused LayerNorm -> matmul (+bias, +QuickGELU).  K kept whole so LN stats are
# exact.  The normalized + bf16-cast rows are computed once per row tile into a
# VMEM scratch (pl.when(j == 0), j axis "arbitrary") and reused for all N tiles.
# Optional out_split=s emits the output as (s, M, N/s) directly via the out_spec
# index map (used for the packed QKV projection -> no HBM transpose later).
# ----------------------------------------------------------------------------

def _ln_linear_kernel(x_ref, g_ref, bln_ref, w_ref, *rest,
                      activation, eps, has_bias):
    if has_bias:
        bias_ref, o_ref, h_ref = rest
    else:
        bias_ref = None
        o_ref, h_ref = rest

    @pl.when(pl.program_id(1) == 0)
    def _():
        x = x_ref[...].astype(jnp.float32)
        mean = jnp.mean(x, axis=-1, keepdims=True)
        var = jnp.mean(jnp.square(x - mean), axis=-1, keepdims=True)
        h = (x - mean) * lax.rsqrt(var + eps)
        h = h * g_ref[...].astype(jnp.float32) + bln_ref[...].astype(jnp.float32)
        h_ref[...] = h.astype(jnp.bfloat16)

    w = w_ref[...]
    w = w.reshape(w.shape[-2], w.shape[-1]).astype(jnp.bfloat16)
    y = jnp.dot(h_ref[...], w, preferred_element_type=jnp.float32)
    if has_bias:
        bb = bias_ref[...]
        y = y + bb.reshape(1, bb.shape[-1]).astype(jnp.float32)
    if activation == "quick_gelu":
        y = y * jax.nn.sigmoid(1.702 * y)
    o_ref[...] = y.reshape(o_ref.shape).astype(o_ref.dtype)


def ln_linear(x, g, bln, w, b=None, activation=None, eps=1e-5,
              tm=512, tn=512, out_split=None):
    """LayerNorm(x; g, bln) @ w (+ b) fused into a single Pallas call.
    out_split=None: w is (K, N) -> returns (M, N).
    out_split=s:    w is (s, K, Ns), b is (s, Ns) -> returns (s, M, Ns)."""
    M, K = x.shape
    tm = min(tm, _round_up(M, 8))
    Mp = _round_up(M, tm)
    xp = _pad2d(x, Mp, K)                        # K unpadded -> exact LN statistics

    in_specs = [pl.BlockSpec((tm, K), lambda i, j: (i, 0)),
                pl.BlockSpec((1, K), lambda i, j: (0, 0)),
                pl.BlockSpec((1, K), lambda i, j: (0, 0))]
    args = [xp, g.reshape(1, K), bln.reshape(1, K)]

    if out_split is None:
        N = w.shape[1]
        tn = _pick_tile(N, tn)
        Np = _round_up(N, tn)
        nj = Np // tn
        in_specs.append(pl.BlockSpec((K, tn), lambda i, j: (0, j)))
        args.append(_pad2d(w, K, Np))
        if b is not None:
            in_specs.append(pl.BlockSpec((1, tn), lambda i, j: (0, j)))
            args.append(_pad2d(b.reshape(1, N), 1, Np))
        out_shape = jax.ShapeDtypeStruct((Mp, Np), x.dtype)
        out_spec = pl.BlockSpec((tm, tn), lambda i, j: (i, j))
    else:
        s, Kw, Ns = w.shape
        assert s == out_split and Kw == K
        tn = _pick_tile(Ns, tn)
        if Ns % tn != 0:
            tn = Ns
        nj_per = Ns // tn
        nj = s * nj_per
        in_specs.append(pl.BlockSpec(
            (1, K, tn), lambda i, j: (j // nj_per, 0, j % nj_per)))
        args.append(w)
        if b is not None:
            in_specs.append(pl.BlockSpec(
                (1, 1, tn), lambda i, j: (j // nj_per, 0, j % nj_per)))
            args.append(b.reshape(s, 1, Ns))
        out_shape = jax.ShapeDtypeStruct((s, Mp, Ns), x.dtype)
        out_spec = pl.BlockSpec((1, tm, tn),
                                lambda i, j: (j // nj_per, i, j % nj_per))

    out = pl.pallas_call(
        functools.partial(_ln_linear_kernel, activation=activation, eps=eps,
                          has_bias=b is not None),
        grid=(Mp // tm, nj),
        in_specs=in_specs,
        out_specs=out_spec,
        out_shape=out_shape,
        scratch_shapes=[pltpu.VMEM((tm, K), jnp.bfloat16)],
        compiler_params=pltpu.CompilerParams(
            dimension_semantics=("parallel", "arbitrary"),
            vmem_limit_bytes=_vmem_limit_bytes()),
    )(*args)
    if out_split is None:
        return out[:M, :w.shape[1]]
    return out[:, :M, :]


# ----------------------------------------------------------------------------
# Standalone LayerNorm (only ln_pre, which feeds the residual stream directly)
# ----------------------------------------------------------------------------

def _layernorm_kernel(x_ref, g_ref, b_ref, o_ref, *, eps):
    x = x_ref[...].astype(jnp.float32)
    mean = jnp.mean(x, axis=-1, keepdims=True)
    var = jnp.mean(jnp.square(x - mean), axis=-1, keepdims=True)
    y = (x - mean) * lax.rsqrt(var + eps)
    o_ref[...] = (y * g_ref[...] + b_ref[...]).astype(o_ref.dtype)


def layer_norm(x, g, b, eps=1e-5, tm=512):
    M, D = x.shape
    tm = min(tm, _round_up(M, 8))
    Mp = _round_up(M, tm)
    xp = _pad2d(x, Mp, D)
    out = pl.pallas_call(
        functools.partial(_layernorm_kernel, eps=eps),
        grid=(Mp // tm,),
        in_specs=[pl.BlockSpec((tm, D), lambda i: (i, 0)),
                  pl.BlockSpec((1, D), lambda i: (0, 0)),
                  pl.BlockSpec((1, D), lambda i: (0, 0))],
        out_specs=pl.BlockSpec((tm, D), lambda i: (i, 0)),
        out_shape=jax.ShapeDtypeStruct((Mp, D), x.dtype),
        compiler_params=pltpu.CompilerParams(dimension_semantics=("parallel",)),
    )(xp, g.reshape(1, D), b.reshape(1, D))
    return out[:M]


# ----------------------------------------------------------------------------
# Multi-head attention.  Grid is (B, head_groups); each step gets the (3,1,S,gD)
# q/k/v slice of its head group (so the VMEM working set is per-group, not per
# full model dim), slices individual heads via static ref slices, uses
# lax.dot_general so k is never transposed, builds the causal mask in-kernel via
# iota, and writes one lane-dense (S, gD) block (gD = 128 for real CLIP heads).
# ----------------------------------------------------------------------------

def _head_group(heads, head_dim):
    """Heads per grid step so group*head_dim is lane-dense (128) or the full D."""
    if head_dim % 128 == 0:
        return 1
    if 128 % head_dim == 0:
        g = min(heads, 128 // head_dim)
        while heads % g:
            g -= 1
        if (g * head_dim) % 128 == 0 or g == heads:
            return g
    return heads


def _mha_kernel(qkv_ref, o_ref, *, group, head_dim, causal, scale):
    S = qkv_ref.shape[2]
    if causal:
        row = lax.broadcasted_iota(jnp.int32, (S, S), 0)
        col = lax.broadcasted_iota(jnp.int32, (S, S), 1)
        keep = col <= row
    outs = []
    for h in range(group):                        # group is small & static
        lo, hi = h * head_dim, (h + 1) * head_dim
        q = (qkv_ref[0, 0, :, lo:hi].astype(jnp.float32) * scale).astype(jnp.bfloat16)
        k = qkv_ref[1, 0, :, lo:hi].astype(jnp.bfloat16)
        v = qkv_ref[2, 0, :, lo:hi].astype(jnp.bfloat16)
        # QK^T without materializing k.T (contract on k's last dim).
        s = lax.dot_general(q, k, (((1,), (1,)), ((), ())),
                            preferred_element_type=jnp.float32)
        if causal:
            s = jnp.where(keep, s, -1e30)
        s = s - jnp.max(s, axis=-1, keepdims=True)
        p = jnp.exp(s)
        p = p * pl.reciprocal(jnp.sum(p, axis=-1, keepdims=True), approx=True)
        outs.append(jnp.dot(p.astype(jnp.bfloat16), v,
                            preferred_element_type=jnp.float32))
    res = outs[0] if group == 1 else jnp.concatenate(outs, axis=-1)
    o_ref[0] = res.astype(o_ref.dtype)            # one lane-dense (S, gD) store


def mha(qkv, heads, causal, scale):
    """qkv: (3, B, S, D) with per-head contiguous last dim -> (B, S, D)."""
    _, B, S, D = qkv.shape
    head_dim = D // heads
    group = _head_group(heads, head_dim)
    hg = heads // group
    gD = group * head_dim
    return pl.pallas_call(
        functools.partial(_mha_kernel, group=group, head_dim=head_dim,
                          causal=causal, scale=scale),
        grid=(B, hg),
        in_specs=[pl.BlockSpec((3, 1, S, gD), lambda b, g: (0, b, 0, g))],
        out_specs=pl.BlockSpec((1, S, gD), lambda b, g: (b, 0, g)),
        out_shape=jax.ShapeDtypeStruct((B, S, D), qkv.dtype),
        compiler_params=pltpu.CompilerParams(
            dimension_semantics=("parallel", "parallel"),
            vmem_limit_bytes=_vmem_limit_bytes()),
    )(qkv)


# ----------------------------------------------------------------------------
# Fused CLIP logits: text features are L2-normalized once into a VMEM scratch,
# image tiles are normalized and matmul'ed against them; logit_scale in SMEM.
# ----------------------------------------------------------------------------

def _logits_kernel(ls_ref, img_ref, txt_ref, o_ref, tnorm_ref):
    @pl.when(pl.program_id(0) == 0)
    def _():
        t = txt_ref[...].astype(jnp.float32)
        tnorm_ref[...] = t * lax.rsqrt(
            jnp.maximum(jnp.sum(t * t, -1, keepdims=True), 1e-12))
    img = img_ref[...].astype(jnp.float32)
    img = img * lax.rsqrt(jnp.maximum(jnp.sum(img * img, -1, keepdims=True), 1e-12))
    scale = ls_ref[0]                              # scalar from SMEM
    o_ref[...] = (scale * lax.dot_general(
        img, tnorm_ref[...], (((1,), (1,)), ((), ())),
        preferred_element_type=jnp.float32)).astype(o_ref.dtype)


def clip_logits(image_features, text_features, logit_scale):
    B, D = image_features.shape
    C = text_features.shape[0]
    tb = min(128, _round_up(B, 8))
    Bp = _round_up(B, tb)
    img_p = _pad2d(image_features, Bp, D)
    ls = jnp.exp(logit_scale).reshape(1)           # exp of the scalar done in glue
    out = pl.pallas_call(
        _logits_kernel,
        grid=(Bp // tb,),
        in_specs=[pl.BlockSpec(memory_space=pltpu.MemorySpace.SMEM),
                  pl.BlockSpec((tb, D), lambda i: (i, 0)),
                  pl.BlockSpec((C, D), lambda i: (0, 0))],
        out_specs=pl.BlockSpec((tb, C), lambda i: (i, 0)),
        out_shape=jax.ShapeDtypeStruct((Bp, C), image_features.dtype),
        scratch_shapes=[pltpu.VMEM((C, D), jnp.float32)],
        compiler_params=pltpu.CompilerParams(dimension_semantics=("arbitrary",)),
    )(ls, img_p, text_features)
    return out[:B]


# ----------------------------------------------------------------------------
# Model pieces (glue in plain JAX, compute in the Pallas kernels above)
# ----------------------------------------------------------------------------

def transformer_block(blk, x, heads, causal):
    """CLIP ResidualAttentionBlock: x += attn(ln1(x)); x += mlp(ln2(x))."""
    B, S, D = x.shape
    head_dim = D // heads
    scale = 1.0 / math.sqrt(head_dim)
    xf = x.reshape(B * S, D)

    # ln1 fused into QKV; emitted directly as (3, B*S, D), heads sliced in-kernel.
    qkv = ln_linear(xf, blk["ln1_g"], blk["ln1_b"], blk["qkv_w"], blk["qkv_b"],
                    out_split=3).reshape(3, B, S, D)
    o = mha(qkv, heads=heads, causal=causal, scale=scale)          # (B, S, D)
    # out-projection with the residual add fused into the matmul finalize.
    xf = linear(o.reshape(B * S, D), blk["out_w"], blk["out_b"], residual=xf)

    # ln2 fused into fc1 (+QuickGELU); fc2 has the second residual add fused.
    h = ln_linear(xf, blk["ln2_g"], blk["ln2_b"], blk["fc1_w"], blk["fc1_b"],
                  activation="quick_gelu")
    xf = linear(h, blk["fc2_w"], blk["fc2_b"], residual=xf)
    return xf.reshape(B, S, D)


def vision_encoder(p, image):
    """CLIP VisionTransformer.  layout: image is NCHW (B, C, H, W)."""
    B, C, H, W = image.shape
    ps = p["patch_size"]
    gh, gw = H // ps, W // ps
    # conv1 (kernel=stride=patch) == im2col + tiled matmul.  Single NCHW->NHWC
    # transpose so the reduction dim (ps*ps*C) is contiguous; conv_w is stored
    # bf16 in the matching (ps*ps*C, width) layout.
    # TODO(synk): a real CLIP checkpoint's conv weight (width, C, ps, ps) would
    # need a one-time permute to this layout.
    x_nhwc = jnp.transpose(image, (0, 2, 3, 1))                    # (B, H, W, C)
    patches = (x_nhwc.reshape(B, gh, ps, gw, ps, C)
                     .transpose(0, 1, 3, 2, 4, 5)
                     .reshape(B * gh * gw, ps * ps * C))
    width = p["conv_w"].shape[1]
    x = linear(patches, p["conv_w"]).reshape(B, gh * gw, width)    # no bias
    cls = jnp.broadcast_to(p["class_embedding"][None, None, :], (B, 1, width))
    x = jnp.concatenate([cls, x], axis=1)
    x = x + p["positional_embedding"][None]
    S = x.shape[1]
    x = layer_norm(x.reshape(B * S, width),
                   p["ln_pre_g"], p["ln_pre_b"]).reshape(B, S, width)
    for blk in p["blocks"]:
        x = transformer_block(blk, x, p["heads"], causal=False)    # no mask (vision)
    # ln_post + projection fused (LN is per-row; applied only to the CLS row).
    return ln_linear(x[:, 0, :], p["ln_post_g"], p["ln_post_b"], p["proj"])


def prompt_learner(p):
    """class_token_position == 'end': prompts = cat([prefix, ctx, suffix], dim=1)."""
    ctx = p["ctx"]                                                 # (n_ctx, D)
    prefix = p["token_prefix"]                                     # (n_cls, 1, D)
    suffix = p["token_suffix"]                                     # (n_cls, S-1-n_ctx, D)
    n_cls = prefix.shape[0]
    ctx_b = jnp.broadcast_to(ctx[None], (n_cls,) + ctx.shape)
    return jnp.concatenate([prefix, ctx_b, suffix], axis=1)        # (n_cls, S, D)


def text_encoder(p, prompts, tokenized_prompts):
    n_cls, S, D = prompts.shape
    x = prompts + p["positional_embedding"][None]
    for blk in p["blocks"]:
        x = transformer_block(blk, x, p["heads"], causal=True)     # in-kernel causal mask
    eot = jnp.argmax(tokenized_prompts, axis=-1)                   # EOT token position
    x_eot = x[jnp.arange(n_cls), eot]                              # (n_cls, D)
    # ln_final + text_projection fused; LN is per-token so gathering first is exact.
    return ln_linear(x_eot, p["ln_final_g"], p["ln_final_b"], p["text_projection"])


def custom_clip_forward(params, image, tokenized_prompts):
    image_features = vision_encoder(params["visual"], image)
    prompts = prompt_learner(params["prompt"])
    text_features = text_encoder(params["text"], prompts, tokenized_prompts)
    # fused: normalize + logit_scale.exp() * image_features @ text_features.T
    return clip_logits(image_features, text_features, params["logit_scale"])


# ----------------------------------------------------------------------------
# Deterministic synthetic parameter construction (weights bf16-at-rest)
# ----------------------------------------------------------------------------

def _block_params(keys, d):
    k = iter(keys)
    wgt = lambda shape: (jax.random.normal(next(k), shape, jnp.float32) * 0.02
                         ).astype(jnp.bfloat16)
    return dict(
        ln1_g=jnp.ones((d,), jnp.float32), ln1_b=jnp.zeros((d,), jnp.float32),
        qkv_w=wgt((3, d, d)), qkv_b=jnp.zeros((3, d), jnp.float32),   # pre-split QKV
        out_w=wgt((d, d)), out_b=jnp.zeros((d,), jnp.float32),
        ln2_g=jnp.ones((d,), jnp.float32), ln2_b=jnp.zeros((d,), jnp.float32),
        fc1_w=wgt((d, 4 * d)), fc1_b=jnp.zeros((4 * d,), jnp.float32),
        fc2_w=wgt((4 * d, d)), fc2_b=jnp.zeros((d,), jnp.float32),
    )


def init_params(key, cfg):
    keys = list(jax.random.split(key, 64))
    ki = iter(keys)
    nrm = lambda shape: jax.random.normal(next(ki), shape, jnp.float32) * 0.02
    wgt = lambda shape: nrm(shape).astype(jnp.bfloat16)

    d_v, d_t, d_e = cfg["vision_width"], cfg["ctx_dim"], cfg["embed_dim"]
    ps, img = cfg["patch_size"], cfg["image_size"]
    n_patches = (img // ps) ** 2

    visual = dict(
        patch_size=ps, heads=cfg["vision_heads"],
        conv_w=wgt((ps * ps * cfg["channels"], d_v)),              # (ps*ps*C, width)
        class_embedding=nrm((d_v,)),
        positional_embedding=nrm((n_patches + 1, d_v)),
        ln_pre_g=jnp.ones((d_v,), jnp.float32), ln_pre_b=jnp.zeros((d_v,), jnp.float32),
        ln_post_g=jnp.ones((d_v,), jnp.float32), ln_post_b=jnp.zeros((d_v,), jnp.float32),
        proj=wgt((d_v, d_e)),
        blocks=[_block_params(jax.random.split(next(ki), 8), d_v)
                for _ in range(cfg["vision_layers"])],
    )

    text = dict(
        heads=cfg["text_heads"],
        positional_embedding=nrm((cfg["seq_len"], d_t)),
        ln_final_g=jnp.ones((d_t,), jnp.float32), ln_final_b=jnp.zeros((d_t,), jnp.float32),
        text_projection=wgt((d_t, d_e)),
        blocks=[_block_params(jax.random.split(next(ki), 8), d_t)
                for _ in range(cfg["text_layers"])],
    )

    # --- PromptLearner buffers (synthetic tokenizer: SOT=1, EOT=vocab-1) ---
    # TODO(synk): real CLIP BPE tokenization has no Pallas/JAX equivalent; token
    # ids are synthesized deterministically instead.
    n_cls, n_ctx, S, vocab = cfg["n_cls"], cfg["n_ctx"], cfg["seq_len"], cfg["vocab"]
    name_lens = [1 + (i % 3) for i in range(n_cls)]
    tokens = []
    for i in range(n_cls):
        row = [1] + [3] * n_ctx + [10 + i + j for j in range(name_lens[i])] + [vocab - 1]
        row = row + [0] * (S - len(row))
        tokens.append(row)
    tokenized_prompts = jnp.array(tokens, jnp.int32)               # (n_cls, S)

    token_embedding = nrm((vocab, d_t))
    embedding = token_embedding[tokenized_prompts]                 # (n_cls, S, d_t)
    prompt = dict(
        ctx=nrm((n_ctx, d_t)),                                     # learnable context
        token_prefix=embedding[:, :1, :],                          # SOT
        token_suffix=embedding[:, 1 + n_ctx:, :],                  # class name + EOT + pad
    )

    params = dict(
        visual=visual, text=text, prompt=prompt,
        logit_scale=jnp.array(math.log(1.0 / 0.07), jnp.float32),
    )
    return params, tokenized_prompts


# ----------------------------------------------------------------------------

if __name__ == "__main__":
    cfg = dict(
        image_size=16, patch_size=8, channels=3,
        vision_width=32, vision_heads=2, vision_layers=2,
        ctx_dim=32, text_heads=2, text_layers=2, seq_len=16, vocab=64,
        embed_dim=32, n_ctx=4, n_cls=3, batch=2,
    )

    root = jax.random.PRNGKey(0)
    k_params, k_img = jax.random.split(root)
    params, tokenized_prompts = init_params(k_params, cfg)

    # layout: NCHW, matching the PyTorch reference module's conv input.
    image = jax.random.normal(
        k_img, (cfg["batch"], cfg["channels"], cfg["image_size"], cfg["image_size"]),
        jnp.float32)

    logits = custom_clip_forward(params, image, tokenized_prompts)
    logits = jax.block_until_ready(logits)
    assert logits.shape == (cfg["batch"], cfg["n_cls"])
    assert bool(jnp.all(jnp.isfinite(logits)))
    print("KERNEL_OK")
</pallas_src>

<mosaic_0001>
module attributes {stable_mosaic.version = 11 : i64} {
  func.func @_matmul_kernel(%arg0: i32, %arg1: i32, %arg2: i32, %arg3: memref<8x192xf32, #tpu.memory_space<vmem>>, %arg4: memref<192x32xbf16, #tpu.memory_space<vmem>>, %arg5: memref<8x32xf32, #tpu.memory_space<vmem>>, %arg6: memref<8x32xf32, #tpu.memory_space<vmem>>) attributes {dimension_semantics = [#tpu.dimension_semantics<parallel>, #tpu.dimension_semantics<parallel>, #tpu.dimension_semantics<arbitrary>], iteration_bounds = array<i64: 1, 1, 1>, scalar_prefetch = 0 : i64, scratch_operands = 1 : i64, tpu.core_type = #tpu.core_type<tc>, window_params = [{transform_indices = @transform_0, window_bounds = array<i64: 8, 192>}, {transform_indices = @transform_1, window_bounds = array<i64: 192, 32>}, {transform_indices = @transform_2, window_bounds = array<i64: 8, 32>}]} {
    %c0_i32 = arith.constant 0 : i32
    %0 = arith.cmpi eq, %arg2, %c0_i32 : i32
    %1 = arith.extui %0 : i1 to i32
    %c0_i32_0 = arith.constant 0 : i32
    %2 = arith.cmpi ne, %1, %c0_i32_0 : i32
    scf.if %2 {
      %cst_10 = arith.constant 0.000000e+00 : f32
      %13 = vector.broadcast %cst_10 : f32 to vector<8x32xf32>
      %c0_11 = arith.constant 0 : index
      %c0_12 = arith.constant 0 : index
      %14 = vector.load %arg6[%c0_11, %c0_12] : memref<8x32xf32, #tpu.memory_space<vmem>>, vector<8x32xf32>
      tpu.vector_store %arg6[%c0_11, %c0_12], %13 {strides = array<i32>} : memref<8x32xf32, #tpu.memory_space<vmem>>, vector<8x32xf32>,
    } else {
    }
    %c0 = arith.constant 0 : index
    %c0_1 = arith.constant 0 : index
    %3 = vector.load %arg6[%c0, %c0_1] : memref<8x32xf32, #tpu.memory_space<vmem>>, vector<8x32xf32>
    %c0_2 = arith.constant 0 : index
    %c0_3 = arith.constant 0 : index
    %4 = vector.load %arg3[%c0_2, %c0_3] : memref<8x192xf32, #tpu.memory_space<vmem>>, vector<8x192xf32>
    %5 = arith.truncf %4 : vector<8x192xf32> to vector<8x192xbf16>
    %c0_4 = arith.constant 0 : index
    %c0_5 = arith.constant 0 : index
    %6 = vector.load %arg4[%c0_4, %c0_5] : memref<192x32xbf16, #tpu.memory_space<vmem>>, vector<192x32xbf16>
    %cst = arith.constant dense<0.000000e+00> : vector<8x32xf32>
    %7 = tpu.matmul %5, %6, %cst {dimension_numbers = #tpu.dot_dimension_numbers<[1], [0], [0], [1], [0, 0, 1, 1], [], []>} : vector<8x192xbf16>, vector<192x32xbf16>, vector<8x32xf32> -> vector<8x32xf32>
    %8 = arith.addf %3, %7 : vector<8x32xf32>
    %c0_6 = arith.constant 0 : index
    %c0_7 = arith.constant 0 : index
    %9 = vector.load %arg6[%c0_6, %c0_7] : memref<8x32xf32, #tpu.memory_space<vmem>>, vector<8x32xf32>
    tpu.vector_store %arg6[%c0_6, %c0_7], %8 {strides = array<i32>} : memref<8x32xf32, #tpu.memory_space<vmem>>, vector<8x32xf32>,
    %c0_i32_8 = arith.constant 0 : i32
    %10 = arith.cmpi eq, %arg2, %c0_i32_8 : i32
    %11 = arith.extui %10 : i1 to i32
    %c0_i32_9 = arith.constant 0 : i32
    %12 = arith.cmpi ne, %11, %c0_i32_9 : i32
    scf.if %12 {
      %c0_10 = arith.constant 0 : index
      %c0_11 = arith.constant 0 : index
      %13 = vector.load %arg6[%c0_10, %c0_11] : memref<8x32xf32, #tpu.memory_space<vmem>>, vector<8x32xf32>
      %c0_12 = arith.constant 0 : index
      %c0_13 = arith.constant 0 : index
      %14 = vector.load %arg5[%c0_12, %c0_13] : memref<8x32xf32, #tpu.memory_space<vmem>>, vector<8x32xf32>
      tpu.vector_store %arg5[%c0_12, %c0_13], %13 {strides = array<i32>} : memref<8x32xf32, #tpu.memory_space<vmem>>, vector<8x32xf32>,
    } else {
    }
    return
  }
  func.func @transform_0(%arg0: i32, %arg1: i32, %arg2: i32) -> (i32, i32) {
    %c0_i32 = arith.constant 0 : i32
    return %arg0, %arg2 : i32, i32
  }
  func.func @transform_1(%arg0: i32, %arg1: i32, %arg2: i32) -> (i32, i32) {
    %c0_i32 = arith.constant 0 : i32
    return %arg2, %arg1 : i32, i32
  }
  func.func @transform_2(%arg0: i32, %arg1: i32, %arg2: i32) -> (i32, i32) {
    %c0_i32 = arith.constant 0 : i32
    return %arg0, %arg1 : i32, i32
  }
}

</mosaic_0001>

<llo_original>
// kernel: tpu_custom_call.1
$region0: #{tpu_custom_call.1}
  #allocation0 [shape = 'u32[]', space=smem, size = 0x4, offset = 0x4, fixed_abs, tag = 'smem constant byte address 0x4 - core index']
  #allocation1 [shape = 'u32[72,128]{1,0:T(1,128)}', space=vmem, size = 0x9000, scoped, tag = 'internal scratch']
  #allocation2 [shape = 'f32[8,32]{1,0:T(8,128)}', space=vmem, size = 0x1000, scoped, tag = 'scratch operand']
  %s0 = inlined_call_operand.vmem [shape: f32[8,192], index: 0, kind: input, shape index: {}]
  %s1 = inlined_call_operand.vmem [shape: bf16[192,32], index: 1, kind: input, shape index: {}]
  %s2 = inlined_call_operand.hbm [shape: f32[8,32], index: 2, kind: output, shape index: {}]
  %s3 = sld [smem:[#allocation0]]
  $region26: #{tpu_custom_call.1} parent=0
    _
  %s5 = ssub.s32 1, %s3
  %s6 = scalar_select 0, %s5, %s3
  $region1: #{tpu_custom_call.1} parent=0
    #allocation3 [shape = 'u8[4096]{0}', space=vmem, size = 0x1000, scoped, tag = 'output window, operand 0, single buffered']
    #allocation4 [shape = 's32[1]{0}', space=sflag, size = 0x4, scoped, tag = 'scoped memory for tpu_custom_call.1']
    %7 = vsyncpa [#allocation4], 0
    // Predicated region
    $region2: #{tpu_custom_call.1} parent=1 // pred_check
      _
    $region3: #{tpu_custom_call.1} parent=1 // pred_check_branch
      %9 = sbr.rel (0) target = $region5
    $region4: #{tpu_custom_call.1} parent=1 // pred_region
      _
    $region5: #{tpu_custom_call.1} parent=1 // pred_fallthru
      _
    // Predicated region
    $region6: #{tpu_custom_call.1} parent=1 // pred_check
      _
    $region7: #{tpu_custom_call.1} parent=1 // pred_check_branch
      %11 = sbr.rel (0) target = $region9
    $region8: #{tpu_custom_call.1} parent=1 // pred_region
      _
    $region9: #{tpu_custom_call.1} parent=1 // pred_fallthru
      _
    %p13 = scmp.eq.s32.totalorder 0, 0
    // Predicated region
    $region10: #{tpu_custom_call.1} parent=1 // pred_check
      %p14 = pneg %p13
    $region11: #{tpu_custom_call.1} parent=1 // pred_check_branch
      %16 = sbr.rel (%p14) target = $region13
    $region12: #{tpu_custom_call.1} parent=1 // pred_region
      %vm17 = vcmask 261120
      %18 = vst.msk [vmem:[#allocation2] sm:$0xff] %vm17, 0.0
    $region13: #{tpu_custom_call.1} parent=1 // pred_fallthru
      _
    %v19 = vld [vmem:[#allocation2] sm:$0xff]
    %v20 = vld [vmem:[%s0] sm:$0xff]
    %v21 = vld [vmem:[%s0 + $0x8] sm:$0xff]
    %v22 = vpack.c.bf16 %v20, %v20
    %v23 = vpack.c.bf16 %v21, %v21
    %v24 = vld [vmem:[%s1] sm:$0xf]
    %v25 = vld [vmem:[%s1 + $0x4] sm:$0xf]
    %v26 = vld [vmem:[%s1 + $0x8] sm:$0xf]
    %v27 = vld [vmem:[%s1 + $0xc] sm:$0xf]
    %v28 = vld [vmem:[%s1 + $0x10] sm:$0xf]
    %v29 = vld [vmem:[%s1 + $0x14] sm:$0xf]
    %v30 = vld [vmem:[%s1 + $0x18] sm:$0xf]
    %v31 = vld [vmem:[%s1 + $0x1c] sm:$0xf]
    %v32 = vld [vmem:[%s1 + $0x20] sm:$0xf]
    %v33 = vld [vmem:[%s1 + $0x24] sm:$0xf]
    %v34 = vld [vmem:[%s1 + $0x28] sm:$0xf]
    %v35 = vld [vmem:[%s1 + $0x2c] sm:$0xf]
    %v36 = vld [vmem:[%s1 + $0x30] sm:$0xf]
    %v37 = vld [vmem:[%s1 + $0x34] sm:$0xf]
    %v38 = vld [vmem:[%s1 + $0x38] sm:$0xf]
    %v39 = vld [vmem:[%s1 + $0x3c] sm:$0xf]
    %v40 = vld [vmem:[%s1 + $0x40] sm:$0xf]
    %v41 = vld [vmem:[%s1 + $0x44] sm:$0xf]
    %v42 = vld [vmem:[%s1 + $0x48] sm:$0xf]
    %v43 = vld [vmem:[%s1 + $0x4c] sm:$0xf]
    %v44 = vld [vmem:[%s1 + $0x50] sm:$0xf]
    %v45 = vld [vmem:[%s1 + $0x54] sm:$0xf]
    %v46 = vld [vmem:[%s1 + $0x58] sm:$0xf]
    %v47 = vld [vmem:[%s1 + $0x5c] sm:$0xf]
    %v72 = vunpack.c.l.b16 %v24
    %v73 = vunpack.c.l.b16 %v25
    %v74 = vunpack.c.l.b16 %v26
    %v75 = vunpack.c.l.b16 %v27
    %v76 = vunpack.c.l.b16 %v28
    %v77 = vunpack.c.l.b16 %v29
    %v78 = vunpack.c.l.b16 %v30
    %v79 = vunpack.c.l.b16 %v31
    %v80 = vunpack.c.l.b16 %v32
    %v81 = vunpack.c.l.b16 %v33
    %v82 = vunpack.c.l.b16 %v34
    %v83 = vunpack.c.l.b16 %v35
    %v84 = vunpack.c.l.b16 %v36
    %v85 = vunpack.c.l.b16 %v37
    %v86 = vunpack.c.l.b16 %v38
    %v87 = vunpack.c.l.b16 %v39
    %v88 = vunpack.c.l.b16 %v40
    %v89 = vunpack.c.l.b16 %v41
    %v90 = vunpack.c.l.b16 %v42
    %v91 = vunpack.c.l.b16 %v43
    %v92 = vunpack.c.l.b16 %v44
    %v93 = vunpack.c.l.b16 %v45
    %v94 = vunpack.c.l.b16 %v46
    %v95 = vunpack.c.l.b16 %v47
    %v96 = vpack.c.b16 %v73, %v72
    %v97 = vpack.c.b16 %v75, %v74
    %v98 = vpack.c.b16 %v77, %v76
    %v99 = vpack.c.b16 %v79, %v78
    %v100 = vpack.c.b16 %v81, %v80
    %v101 = vpack.c.b16 %v83, %v82
    %v102 = vpack.c.b16 %v85, %v84
    %v103 = vpack.c.b16 %v87, %v86
    %v104 = vpack.c.b16 %v89, %v88
    %v105 = vpack.c.b16 %v91, %v90
    %v106 = vpack.c.b16 %v93, %v92
    %v107 = vpack.c.b16 %v95, %v94
    %vm120 = vcmask 523264
    %v122 = vsel %vm120, %v23, 0
    %124 = vmatpush.bf16.msra.mxu0 %v103
    %125 = vmatpush.bf16.msra.mxu0 %v102
    %126 = vmatpush.bf16.msra.mxu0 %v101
    %127 = vmatpush.bf16.msra.mxu0 %v100
    %128 = vmatpush.bf16.msra.mxu0 %v99
    %129 = vmatpush.bf16.msra.mxu0 %v98
    %130 = vmatpush.bf16.msra.mxu0 %v97
    %131 = vmatpush.bf16.msra.mxu0 %v96
    %132 = vmatmul.bf16.gmra.mxu0 %v22
    %v133 = vpop.f32.mrf.mxu0
    %v134 = vadd.f32 0.0, %v133
    %v135 = vpop.f32.mrf.mxu0
    %136 = vdwg.mxu0
    %137 = vmatpush.bf16.msra.mxu0 0
    %138 = vmatpush.bf16.msra.mxu0 0
    %139 = vmatpush.bf16.msra.mxu0 0
    %140 = vmatpush.bf16.msra.mxu0 0
    %141 = vmatpush.bf16.msra.mxu0 %v107
    %142 = vmatpush.bf16.msra.mxu0 %v106
    %143 = vmatpush.bf16.msra.mxu0 %v105
    %144 = vmatpush.bf16.msra.mxu0 %v104
    %145 = vmatmul.bf16.gmra.mxu0 %v122
    %v146 = vpop.f32.mrf.mxu0
    %v147 = vadd.f32 %v134, %v146
    %v148 = vpop.f32.mrf.mxu0
    %149 = vdwg.mxu0
    %v150 = vadd.f32 %v19, %v147
    %vm151 = vcmask 261120
    %152 = vst.msk [vmem:[#allocation2] sm:$0xff] %vm151, %v150
    // Predicated region
    $region14: #{tpu_custom_call.1} parent=1 // pred_check
      %p153 = pneg %p13
    $region15: #{tpu_custom_call.1} parent=1 // pred_check_branch
      %155 = sbr.rel (%p153) target = $region17
    $region16: #{tpu_custom_call.1} parent=1 // pred_region
      %v156 = vld [vmem:[#allocation2] sm:$0xff]
      %157 = vst.msk [vmem:[#allocation3] sm:$0xff] %vm151, %v156
    $region17: #{tpu_custom_call.1} parent=1 // pred_fallthru
      _
    // Predicated region
    $region18: #{tpu_custom_call.1} parent=1 // pred_check
      _
    $region19: #{tpu_custom_call.1} parent=1 // pred_check_branch
      %159 = sbr.rel (0) target = $region21
    $region20: #{tpu_custom_call.1} parent=1 // pred_region
      %161 = vsyncadd [#allocation4], 0
      %s163 = sshll.u32 [#allocation3], 4
      %s164 = int_to_ptr.vmem [resolvable:$true] %s163
      %s165 = sshll.u32 %s2, 4
      %s166 = int_to_ptr.hbm [resolvable:$true] %s165
      %168 = dma.vmem_to_hbm [thread:$0]  %s164, 128, %s166, [#allocation4]
    $region21: #{tpu_custom_call.1} parent=1 // pred_fallthru
      _
    // Predicated region
    $region22: #{tpu_custom_call.1} parent=1 // pred_check
      _
    $region23: #{tpu_custom_call.1} parent=1 // pred_check_branch
      %170 = sbr.rel (0) target = $region25
    $region24: #{tpu_custom_call.1} parent=1 // pred_region
      %172 = dma.done [#allocation4], 128
    $region25: #{tpu_custom_call.1} parent=1 // pred_fallthru
      _
    %173 = vsyncpa [#allocation4], 1

</llo_original>
